<compile_context>
chip_gen: v7x
topology: tpu7x:2x2x1
jax: 0.10.0
libtpu: 0.0.40
codegen_flags: <defaults>
</compile_context>

<pallas_src>
import math
import functools

import jax
import jax.numpy as jnp
from jax import lax
from jax.experimental import pallas as pl
from jax.experimental.pallas import tpu as pltpu


def mfm_conv_kernel(x_ref, w_ref, o_ref, xw_ref, *, H, W, NB, PAD):
    """3x3 conv (stride 1, zero pad 1) + MFM for a block of NB images.

    x_ref:  (NB, Cin, H*W)          input, channels-major, spatial flattened
    w_ref:  (2*Cout, 9*Cin + 1)     weights with bias folded as last column
    o_ref:  (NB*Cout, H*W)          output slab (full (8,128*k) tiles)
    xw_ref: (Cin, NB*(2*PAD+H*W))   VMEM scratch: per-image zero-padded rows
    """
    Cin = x_ref.shape[1]
    HW = H * W
    NBHW = NB * HW
    Cout = w_ref.shape[0] // 2
    stride_img = PAD + HW + PAD

    # Zero only the pad strips, and only once: scratch persists across grid
    # iterations and the interior is fully overwritten every step.
    @pl.when(pl.program_id(0) == 0)
    def _():
        zpad = jnp.zeros((Cin, PAD), jnp.float32)
        for n in range(NB):
            base = n * stride_img
            xw_ref[:, base:base + PAD] = zpad
            xw_ref[:, base + PAD + HW:base + stride_img] = zpad

    # Copy each image's interior (lane-aligned: offsets are multiples of 128).
    for n in range(NB):
        base = n * stride_img + PAD
        xw_ref[:, base:base + HW] = x_ref[n].astype(jnp.float32)

    # Horizontal wrap masks, broadcast once (JAX does not CSE broadcasts).
    j = lax.broadcasted_iota(jnp.int32, (1, NBHW), 1) % W
    left_mask = jnp.broadcast_to(j >= 1, (Cin, NBHW))        # tap dx=-1 valid
    right_mask = jnp.broadcast_to(j <= W - 2, (Cin, NBHW))   # tap dx=+1 valid

    # Build the im2col patch in registers: 9 taps as lane-offset reads of the
    # flat padded image (vertically out-of-image taps read the zero pads),
    # plus a ones row so the bias rides inside the matmul (K = 9*Cin + 1).
    taps = []
    for dy in (-1, 0, 1):
        for dx in (-1, 0, 1):
            d = dy * W + dx
            per_img = []
            for n in range(NB):
                s = n * stride_img + PAD + d
                per_img.append(xw_ref[:, s:s + HW])           # (Cin, HW)
            tap = per_img[0] if NB == 1 else jnp.concatenate(per_img, axis=1)
            if dx == -1:
                tap = jnp.where(left_mask, tap, 0.0)
            elif dx == 1:
                tap = jnp.where(right_mask, tap, 0.0)
            taps.append(tap)
    taps.append(jnp.ones((1, NBHW), jnp.float32))             # bias row
    patch = jnp.concatenate(taps, axis=0)                     # (9*Cin+1, NB*HW)

    # One MXU matmul for the whole block.
    # NOTE: at production (LightCNN-scale) channel counts cast both operands
    # to bf16 (native single-pass MXU path); kept f32 here for exact parity
    # with the fp32 PyTorch module at these tiny sizes.
    acc = jnp.dot(w_ref[...], patch, preferred_element_type=jnp.float32)

    # MFM: elementwise max of the two channel halves (VPU).
    val = jnp.maximum(acc[:Cout, :], acc[Cout:, :])           # (Cout, NB*HW)

    # Re-pack (Cout, NB*HW) -> (NB*Cout, HW): lane-aligned slices + sublane
    # concat so the output store is one full, unmasked (8, 256) tile.
    if NB > 1:
        out = jnp.concatenate([val[:, n * HW:(n + 1) * HW] for n in range(NB)],
                              axis=0)
    else:
        out = val
    o_ref[...] = out.astype(o_ref.dtype)


def mfm_pallas(x_nchw, weight_oihw, bias, *, images_per_block=None):
    """mfm (type=1) forward.

    x_nchw:      (N, Cin, H, W)
    weight_oihw: (2*Cout, Cin, 3, 3)
    bias:        (2*Cout,)
    returns:     (N, Cout, H, W)

    images_per_block: images folded per grid step. Default N (single step,
    one big matmul). On v7x set N//2 so both TensorCores are used.
    """
    N, Cin, H, W = x_nchw.shape
    Cout2 = weight_oihw.shape[0]
    Cout = Cout2 // 2
    HW = H * W
    # Lane pad per image side: covers one image row of vertical halo (W+1)
    # and stays a multiple of 128 so interior copies are lane-aligned.
    PAD = max(128, pl.cdiv(W + 1, 128) * 128)

    NB = N if images_per_block is None else images_per_block
    assert N % NB == 0, "images_per_block must divide the batch"
    assert (NB * Cout) % 8 == 0 or NB * Cout == N * Cout, \
        "output block must be sublane-tileable"
    num_blocks = N // NB

    # NCHW -> (N, Cin, H*W) is a free (contiguous) reshape.
    x_flat = x_nchw.reshape(N, Cin, HW).astype(jnp.float32)
    # Weights as (2*Cout, 9*Cin) with columns ordered (kh, kw, cin) to match
    # the in-kernel tap order; bias appended as the last column.
    w2d = jnp.transpose(weight_oihw, (0, 2, 3, 1)).reshape(Cout2, 9 * Cin)
    w_aug = jnp.concatenate(
        [w2d.astype(jnp.float32), bias.reshape(Cout2, 1).astype(jnp.float32)],
        axis=1)                                               # (2*Cout, 9*Cin+1)

    kernel = functools.partial(mfm_conv_kernel, H=H, W=W, NB=NB, PAD=PAD)
    out2d = pl.pallas_call(
        kernel,
        out_shape=jax.ShapeDtypeStruct((N * Cout, HW), x_nchw.dtype),
        grid=(num_blocks,),
        in_specs=[
            pl.BlockSpec((NB, Cin, HW), lambda b: (b, 0, 0)),
            pl.BlockSpec((Cout2, 9 * Cin + 1), lambda b: (0, 0)),
        ],
        out_specs=pl.BlockSpec((NB * Cout, HW), lambda b: (b, 0)),
        scratch_shapes=[
            # Per-image zero-padded flat image, all images side by side.
            pltpu.VMEM((Cin, NB * (2 * PAD + HW)), jnp.float32),
        ],
        compiler_params=pltpu.CompilerParams(
            dimension_semantics=("parallel",)),
    )(x_flat, w_aug)
    # Rows are ordered (n, cout) -> free reshape back to NCHW.
    return out2d.reshape(N, Cout, H, W)


# --------------------------------------------------------------------------
# Pure-JAX reference (correctness check)
# --------------------------------------------------------------------------
def mfm_ref(x_nchw, weight_oihw, bias):
    y = lax.conv_general_dilated(
        x_nchw.astype(jnp.float32), weight_oihw.astype(jnp.float32),
        window_strides=(1, 1), padding=((1, 1), (1, 1)),
        dimension_numbers=("NCHW", "OIHW", "NCHW"),
    ) + bias[None, :, None, None]
    cout = weight_oihw.shape[0] // 2
    return jnp.maximum(y[:, :cout], y[:, cout:])


# --------------------------------------------------------------------------
# Deterministic parameter init (PyTorch Conv2d-like uniform bounds)
# --------------------------------------------------------------------------
def init_params(key, in_channels, out_channels, ksize=3):
    fan_in = in_channels * ksize * ksize
    bound = 1.0 / math.sqrt(fan_in)
    k_w, k_b = jax.random.split(key)
    weight = jax.random.uniform(
        k_w, (2 * out_channels, in_channels, ksize, ksize),
        jnp.float32, -bound, bound)
    b = jax.random.uniform(k_b, (2 * out_channels,), jnp.float32, -bound, bound)
    return weight, b


if __name__ == "__main__":
    key = jax.random.PRNGKey(0)
    kx, kp = jax.random.split(key)

    # Small shapes consistent with the module: batch=2, channels=4, 16x16.
    N, C, H, W = 2, 4, 16, 16
    out_channels = 4
    x = jax.random.normal(kx, (N, C, H, W), jnp.float32)
    weight, bias = init_params(kp, in_channels=C, out_channels=out_channels)

    out = jax.block_until_ready(mfm_pallas(x, weight, bias))
    ref = jax.block_until_ready(mfm_ref(x, weight, bias))

    assert out.shape == (N, out_channels, H, W)
    assert jnp.allclose(out, ref, atol=1e-4, rtol=1e-4), "mismatch vs reference"
    print("KERNEL_OK")
</pallas_src>

<mosaic_0001>
module attributes {stable_mosaic.version = 11 : i64} {
  func.func @mfm_conv_kernel(%arg0: i32, %arg1: memref<2x4x256xf32, #tpu.memory_space<vmem>>, %arg2: memref<8x37xf32, #tpu.memory_space<vmem>>, %arg3: memref<8x256xf32, #tpu.memory_space<vmem>>, %arg4: memref<4x1024xf32, #tpu.memory_space<vmem>>) attributes {dimension_semantics = [#tpu.dimension_semantics<parallel>], iteration_bounds = array<i64: 1>, scalar_prefetch = 0 : i64, scratch_operands = 1 : i64, tpu.core_type = #tpu.core_type<tc>, window_params = [{transform_indices = @transform_0, window_bounds = array<i64: 2, 4, 256>}, {pipeline_mode = #tpu.pipeline_mode<synchronous>, transform_indices = @transform_1, window_bounds = array<i64: 8, 37>}, {transform_indices = @transform_2, window_bounds = array<i64: 8, 256>}]} {
    %c0_i32 = arith.constant 0 : i32
    %0 = arith.cmpi eq, %arg0, %c0_i32 : i32
    %1 = arith.extui %0 : i1 to i32
    %c0_i32_0 = arith.constant 0 : i32
    %2 = arith.cmpi ne, %1, %c0_i32_0 : i32
    scf.if %2 {
      %cst_43 = arith.constant 0.000000e+00 : f32
      %84 = vector.broadcast %cst_43 : f32 to vector<4x128xf32>
      %c0_44 = arith.constant 0 : index
      %c0_45 = arith.constant 0 : index
      %85 = vector.load %arg4[%c0_44, %c0_45] : memref<4x1024xf32, #tpu.memory_space<vmem>>, vector<4x128xf32>
      tpu.vector_store %arg4[%c0_44, %c0_45], %84 {strides = array<i32>} : memref<4x1024xf32, #tpu.memory_space<vmem>>, vector<4x128xf32>,
      %c0_46 = arith.constant 0 : index
      %c384 = arith.constant 384 : index
      %86 = vector.load %arg4[%c0_46, %c384] : memref<4x1024xf32, #tpu.memory_space<vmem>>, vector<4x128xf32>
      tpu.vector_store %arg4[%c0_46, %c384], %84 {strides = array<i32>} : memref<4x1024xf32, #tpu.memory_space<vmem>>, vector<4x128xf32>,
      %c0_47 = arith.constant 0 : index
      %c512 = arith.constant 512 : index
      %87 = vector.load %arg4[%c0_47, %c512] : memref<4x1024xf32, #tpu.memory_space<vmem>>, vector<4x128xf32>
      tpu.vector_store %arg4[%c0_47, %c512], %84 {strides = array<i32>} : memref<4x1024xf32, #tpu.memory_space<vmem>>, vector<4x128xf32>,
      %c0_48 = arith.constant 0 : index
      %c896 = arith.constant 896 : index
      %88 = vector.load %arg4[%c0_48, %c896] : memref<4x1024xf32, #tpu.memory_space<vmem>>, vector<4x128xf32>
      tpu.vector_store %arg4[%c0_48, %c896], %84 {strides = array<i32>} : memref<4x1024xf32, #tpu.memory_space<vmem>>, vector<4x128xf32>,
    } else {
    }
    %c0 = arith.constant 0 : index
    %c0_1 = arith.constant 0 : index
    %c0_2 = arith.constant 0 : index
    %3 = vector.load %arg1[%c0, %c0_1, %c0_2] : memref<2x4x256xf32, #tpu.memory_space<vmem>>, vector<1x4x256xf32>
    %4 = vector.shape_cast %3 : vector<1x4x256xf32> to vector<4x256xf32>
    %c0_3 = arith.constant 0 : index
    %c128 = arith.constant 128 : index
    %5 = vector.load %arg4[%c0_3, %c128] : memref<4x1024xf32, #tpu.memory_space<vmem>>, vector<4x256xf32>
    tpu.vector_store %arg4[%c0_3, %c128], %4 {strides = array<i32>} : memref<4x1024xf32, #tpu.memory_space<vmem>>, vector<4x256xf32>,
    %c1 = arith.constant 1 : index
    %c0_4 = arith.constant 0 : index
    %c0_5 = arith.constant 0 : index
    %6 = vector.load %arg1[%c1, %c0_4, %c0_5] : memref<2x4x256xf32, #tpu.memory_space<vmem>>, vector<1x4x256xf32>
    %7 = vector.shape_cast %6 : vector<1x4x256xf32> to vector<4x256xf32>
    %c0_6 = arith.constant 0 : index
    %c640 = arith.constant 640 : index
    %8 = vector.load %arg4[%c0_6, %c640] : memref<4x1024xf32, #tpu.memory_space<vmem>>, vector<4x256xf32>
    tpu.vector_store %arg4[%c0_6, %c640], %7 {strides = array<i32>} : memref<4x1024xf32, #tpu.memory_space<vmem>>, vector<4x256xf32>,
    %9 = tpu.iota {dimensions = array<i32: 1>} : vector<1x512xi32>
    %c16_i32 = arith.constant 16 : i32
    %c0_i32_7 = arith.constant 0 : i32
    %10 = arith.cmpi eq, %c16_i32, %c0_i32_7 : i32
    %c1_i32 = arith.constant 1 : i32
    %11 = arith.select %10, %c1_i32, %c16_i32 : i32
    %12 = vector.broadcast %11 : i32 to vector<1x512xi32>
    %13 = arith.remsi %9, %12 : vector<1x512xi32>
    %c0_i32_8 = arith.constant 0 : i32
    %14 = vector.broadcast %c0_i32_8 : i32 to vector<1x512xi32>
    %15 = arith.cmpi ne, %13, %14 : vector<1x512xi32>
    %c0_i32_9 = arith.constant 0 : i32
    %16 = vector.broadcast %c0_i32_9 : i32 to vector<1x512xi32>
    %17 = arith.cmpi slt, %13, %16 : vector<1x512xi32>
    %c0_i32_10 = arith.constant 0 : i32
    %18 = arith.cmpi slt, %11, %c0_i32_10 : i32
    %19 = vector.broadcast %18 : i1 to vector<1x512xi1>
    %20 = vector.broadcast %19 : vector<1x512xi1> to vector<1x512xi1>
    %21 = arith.xori %17, %20 : vector<1x512xi1>
    %22 = arith.andi %21, %15 : vector<1x512xi1>
    %23 = vector.broadcast %11 : i32 to vector<1x512xi32>
    %24 = arith.addi %13, %23 : vector<1x512xi32>
    %25 = arith.select %22, %24, %13 : vector<1x512xi1>, vector<1x512xi32>
    %c1_i32_11 = arith.constant 1 : i32
    %26 = vector.broadcast %c1_i32_11 : i32 to vector<1x512xi32>
    %27 = arith.cmpi sge, %25, %26 : vector<1x512xi32>
    %28 = vector.shape_cast %27 : vector<1x512xi1> to vector<1x512xi1>
    %29 = vector.broadcast %28 : vector<1x512xi1> to vector<4x512xi1>
    %c14_i32 = arith.constant 14 : i32
    %30 = vector.broadcast %c14_i32 : i32 to vector<1x512xi32>
    %31 = arith.cmpi sle, %25, %30 : vector<1x512xi32>
    %32 = vector.shape_cast %31 : vector<1x512xi1> to vector<1x512xi1>
    %33 = vector.broadcast %32 : vector<1x512xi1> to vector<4x512xi1>
    %c0_12 = arith.constant 0 : index
    %c111 = arith.constant 111 : index
    %34 = vector.load %arg4[%c0_12, %c111] : memref<4x1024xf32, #tpu.memory_space<vmem>>, vector<4x256xf32>
    %c0_13 = arith.constant 0 : index
    %c623 = arith.constant 623 : index
    %35 = vector.load %arg4[%c0_13, %c623] : memref<4x1024xf32, #tpu.memory_space<vmem>>, vector<4x256xf32>
    %36 = tpu.concatenate %34, %35 in 1 : vector<4x256xf32>, vector<4x256xf32> -> vector<4x512xf32>
    %cst = arith.constant 0.000000e+00 : f32
    %37 = vector.broadcast %cst : f32 to vector<4x512xf32>
    %38 = arith.select %29, %36, %37 : vector<4x512xi1>, vector<4x512xf32>
    %c0_14 = arith.constant 0 : index
    %c112 = arith.constant 112 : index
    %39 = vector.load %arg4[%c0_14, %c112] : memref<4x1024xf32, #tpu.memory_space<vmem>>, vector<4x256xf32>
    %c0_15 = arith.constant 0 : index
    %c624 = arith.constant 624 : index
    %40 = vector.load %arg4[%c0_15, %c624] : memref<4x1024xf32, #tpu.memory_space<vmem>>, vector<4x256xf32>
    %41 = tpu.concatenate %39, %40 in 1 : vector<4x256xf32>, vector<4x256xf32> -> vector<4x512xf32>
    %c0_16 = arith.constant 0 : index
    %c113 = arith.constant 113 : index
    %42 = vector.load %arg4[%c0_16, %c113] : memref<4x1024xf32, #tpu.memory_space<vmem>>, vector<4x256xf32>
    %c0_17 = arith.constant 0 : index
    %c625 = arith.constant 625 : index
    %43 = vector.load %arg4[%c0_17, %c625] : memref<4x1024xf32, #tpu.memory_space<vmem>>, vector<4x256xf32>
    %44 = tpu.concatenate %42, %43 in 1 : vector<4x256xf32>, vector<4x256xf32> -> vector<4x512xf32>
    %cst_18 = arith.constant 0.000000e+00 : f32
    %45 = vector.broadcast %cst_18 : f32 to vector<4x512xf32>
    %46 = arith.select %33, %44, %45 : vector<4x512xi1>, vector<4x512xf32>
    %c0_19 = arith.constant 0 : index
    %c127 = arith.constant 127 : index
    %47 = vector.load %arg4[%c0_19, %c127] : memref<4x1024xf32, #tpu.memory_space<vmem>>, vector<4x256xf32>
    %c0_20 = arith.constant 0 : index
    %c639 = arith.constant 639 : index
    %48 = vector.load %arg4[%c0_20, %c639] : memref<4x1024xf32, #tpu.memory_space<vmem>>, vector<4x256xf32>
    %49 = tpu.concatenate %47, %48 in 1 : vector<4x256xf32>, vector<4x256xf32> -> vector<4x512xf32>
    %cst_21 = arith.constant 0.000000e+00 : f32
    %50 = vector.broadcast %cst_21 : f32 to vector<4x512xf32>
    %51 = arith.select %29, %49, %50 : vector<4x512xi1>, vector<4x512xf32>
    %c0_22 = arith.constant 0 : index
    %c128_23 = arith.constant 128 : index
    %52 = vector.load %arg4[%c0_22, %c128_23] : memref<4x1024xf32, #tpu.memory_space<vmem>>, vector<4x256xf32>
    %c0_24 = arith.constant 0 : index
    %c640_25 = arith.constant 640 : index
    %53 = vector.load %arg4[%c0_24, %c640_25] : memref<4x1024xf32, #tpu.memory_space<vmem>>, vector<4x256xf32>
    %54 = tpu.concatenate %52, %53 in 1 : vector<4x256xf32>, vector<4x256xf32> -> vector<4x512xf32>
    %c0_26 = arith.constant 0 : index
    %c129 = arith.constant 129 : index
    %55 = vector.load %arg4[%c0_26, %c129] : memref<4x1024xf32, #tpu.memory_space<vmem>>, vector<4x256xf32>
    %c0_27 = arith.constant 0 : index
    %c641 = arith.constant 641 : index
    %56 = vector.load %arg4[%c0_27, %c641] : memref<4x1024xf32, #tpu.memory_space<vmem>>, vector<4x256xf32>
    %57 = tpu.concatenate %55, %56 in 1 : vector<4x256xf32>, vector<4x256xf32> -> vector<4x512xf32>
    %cst_28 = arith.constant 0.000000e+00 : f32
    %58 = vector.broadcast %cst_28 : f32 to vector<4x512xf32>
    %59 = arith.select %33, %57, %58 : vector<4x512xi1>, vector<4x512xf32>
    %c0_29 = arith.constant 0 : index
    %c143 = arith.constant 143 : index
    %60 = vector.load %arg4[%c0_29, %c143] : memref<4x1024xf32, #tpu.memory_space<vmem>>, vector<4x256xf32>
    %c0_30 = arith.constant 0 : index
    %c655 = arith.constant 655 : index
    %61 = vector.load %arg4[%c0_30, %c655] : memref<4x1024xf32, #tpu.memory_space<vmem>>, vector<4x256xf32>
    %62 = tpu.concatenate %60, %61 in 1 : vector<4x256xf32>, vector<4x256xf32> -> vector<4x512xf32>
    %cst_31 = arith.constant 0.000000e+00 : f32
    %63 = vector.broadcast %cst_31 : f32 to vector<4x512xf32>
    %64 = arith.select %29, %62, %63 : vector<4x512xi1>, vector<4x512xf32>
    %c0_32 = arith.constant 0 : index
    %c144 = arith.constant 144 : index
    %65 = vector.load %arg4[%c0_32, %c144] : memref<4x1024xf32, #tpu.memory_space<vmem>>, vector<4x256xf32>
    %c0_33 = arith.constant 0 : index
    %c656 = arith.constant 656 : index
    %66 = vector.load %arg4[%c0_33, %c656] : memref<4x1024xf32, #tpu.memory_space<vmem>>, vector<4x256xf32>
    %67 = tpu.concatenate %65, %66 in 1 : vector<4x256xf32>, vector<4x256xf32> -> vector<4x512xf32>
    %c0_34 = arith.constant 0 : index
    %c145 = arith.constant 145 : index
    %68 = vector.load %arg4[%c0_34, %c145] : memref<4x1024xf32, #tpu.memory_space<vmem>>, vector<4x256xf32>
    %c0_35 = arith.constant 0 : index
    %c657 = arith.constant 657 : index
    %69 = vector.load %arg4[%c0_35, %c657] : memref<4x1024xf32, #tpu.memory_space<vmem>>, vector<4x256xf32>
    %70 = tpu.concatenate %68, %69 in 1 : vector<4x256xf32>, vector<4x256xf32> -> vector<4x512xf32>
    %cst_36 = arith.constant 0.000000e+00 : f32
    %71 = vector.broadcast %cst_36 : f32 to vector<4x512xf32>
    %72 = arith.select %33, %70, %71 : vector<4x512xi1>, vector<4x512xf32>
    %cst_37 = arith.constant 1.000000e+00 : f32
    %73 = vector.broadcast %cst_37 : f32 to vector<1x512xf32>
    %74 = tpu.concatenate %38, %41, %46, %51, %54, %59, %64, %67, %72, %73 in 0 : vector<4x512xf32>, vector<4x512xf32>, vector<4x512xf32>, vector<4x512xf32>, vector<4x512xf32>, vector<4x512xf32>, vector<4x512xf32>, vector<4x512xf32>, vector<4x512xf32>, vector<1x512xf32> -> vector<37x512xf32>
    %c0_38 = arith.constant 0 : index
    %c0_39 = arith.constant 0 : index
    %75 = vector.load %arg2[%c0_38, %c0_39] : memref<8x37xf32, #tpu.memory_space<vmem>>, vector<8x37xf32>
    %cst_40 = arith.constant dense<0.000000e+00> : vector<8x512xf32>
    %76 = tpu.matmul %75, %74, %cst_40 {dimension_numbers = #tpu.dot_dimension_numbers<[1], [0], [0], [1], [0, 0, 1, 1], [], []>} : vector<8x37xf32>, vector<37x512xf32>, vector<8x512xf32> -> vector<8x512xf32>
    %77 = vector.extract_strided_slice %76 {offsets = [0, 0], sizes = [4, 512], strides = [1, 1]} : vector<8x512xf32> to vector<4x512xf32>
    %78 = vector.extract_strided_slice %76 {offsets = [4, 0], sizes = [4, 512], strides = [1, 1]} : vector<8x512xf32> to vector<4x512xf32>
    %79 = arith.maximumf %77, %78 : vector<4x512xf32>
    %80 = vector.extract_strided_slice %79 {offsets = [0, 0], sizes = [4, 256], strides = [1, 1]} : vector<4x512xf32> to vector<4x256xf32>
    %81 = vector.extract_strided_slice %79 {offsets = [0, 256], sizes = [4, 256], strides = [1, 1]} : vector<4x512xf32> to vector<4x256xf32>
    %82 = tpu.concatenate %80, %81 in 0 : vector<4x256xf32>, vector<4x256xf32> -> vector<8x256xf32>
    %c0_41 = arith.constant 0 : index
    %c0_42 = arith.constant 0 : index
    %83 = vector.load %arg3[%c0_41, %c0_42] : memref<8x256xf32, #tpu.memory_space<vmem>>, vector<8x256xf32>
    tpu.vector_store %arg3[%c0_41, %c0_42], %82 {strides = array<i32>} : memref<8x256xf32, #tpu.memory_space<vmem>>, vector<8x256xf32>,
    return
  }
  func.func @transform_0(%arg0: i32) -> (i32, i32, i32) {
    %c0_i32 = arith.constant 0 : i32
    %c0_i32_0 = arith.constant 0 : i32
    %c0_i32_1 = arith.constant 0 : i32
    return %arg0, %c0_i32, %c0_i32_0 : i32, i32, i32
  }
  func.func @transform_1(%arg0: i32) -> (i32, i32) {
    %c0_i32 = arith.constant 0 : i32
    %c0_i32_0 = arith.constant 0 : i32
    %c0_i32_1 = arith.constant 0 : i32
    return %c0_i32, %c0_i32_0 : i32, i32
  }
  func.func @transform_2(%arg0: i32) -> (i32, i32) {
    %c0_i32 = arith.constant 0 : i32
    %c0_i32_0 = arith.constant 0 : i32
    return %arg0, %c0_i32 : i32, i32
  }
}

</mosaic_0001>

<llo_original>
// kernel: tpu_custom_call.1
$region0: #{tpu_custom_call.1}
  #allocation0 [shape = 'u32[]', space=smem, size = 0x4, offset = 0x4, fixed_abs, tag = 'smem constant byte address 0x4 - core index']
  #allocation1 [shape = 'u32[144,128]{1,0:T(1,128)}', space=vmem, size = 0x12000, scoped, tag = 'internal scratch']
  #allocation2 [shape = 'f32[4,1024]{1,0:T(4,128)}', space=vmem, size = 0x4000, scoped, tag = 'scratch operand']
  %s0 = inlined_call_operand.hbm [shape: f32[2,4,256], index: 0, kind: input, shape index: {}]
  %s1 = inlined_call_operand.hbm [shape: f32[8,37], index: 1, kind: input, shape index: {}]
  %s2 = inlined_call_operand.hbm [shape: f32[8,256], index: 2, kind: output, shape index: {}]
  %s3 = sld [smem:[#allocation0]]
  $region30: #{tpu_custom_call.1} parent=0
    _
  %s5 = ssub.s32 1, %s3
  %s6 = scalar_select 0, %s5, %s3
  $region1: #{tpu_custom_call.1} parent=0
    #allocation3 [shape = 'u8[8192]{0}', space=vmem, size = 0x2000, scoped, tag = 'input window, operand 0, single buffered']
    #allocation4 [shape = 's32[1]{0}', space=sflag, size = 0x4, scoped, tag = 'scoped memory for tpu_custom_call.1']
    #allocation5 [shape = 's32[1]{0}', space=sflag, size = 0x4, scoped, tag = 'scoped memory for tpu_custom_call.1']
    #allocation6 [shape = 'u8[4096]{0}', space=vmem, size = 0x1000, scoped, tag = 'input window, operand 1, single buffered']
    #allocation7 [shape = 's32[1]{0}', space=sflag, size = 0x4, scoped, tag = 'scoped memory for tpu_custom_call.1']
    #allocation8 [shape = 'u8[8192]{0}', space=vmem, size = 0x2000, scoped, tag = 'output window, operand 0, single buffered']
    %7 = vsyncpa [#allocation4], 0
    %8 = vsyncpa [#allocation7], 0
    %9 = vsyncpa [#allocation5], 0
    // Predicated region
    $region2: #{tpu_custom_call.1} parent=1 // pred_check
      _
    $region3: #{tpu_custom_call.1} parent=1 // pred_check_branch
      %11 = sbr.rel (0) target = $region5
    $region4: #{tpu_custom_call.1} parent=1 // pred_region
      %s13 = ssub.s32 256, 256
      %14 = vsyncadd [#allocation4], %s13
      %s15 = sshll.u32 [#allocation3], 4
      %s16 = int_to_ptr.vmem [resolvable:$true] %s15
      %21 = dma.hbm_to_vmem [thread:$0]  %s0, 256, %s16, [#allocation4], 128, 128, 8
    $region5: #{tpu_custom_call.1} parent=1 // pred_fallthru
      _
    // Predicated region
    $region6: #{tpu_custom_call.1} parent=1 // pred_check
      _
    $region7: #{tpu_custom_call.1} parent=1 // pred_check_branch
      %23 = sbr.rel (0) target = $region9
    $region8: #{tpu_custom_call.1} parent=1 // pred_region
      %s25 = ssub.s32 128, 128
      %26 = vsyncadd [#allocation7], %s25
      %s28 = sshll.u32 [#allocation6], 4
      %s29 = int_to_ptr.vmem [resolvable:$true] %s28
      %31 = dma.hbm_to_vmem [thread:$0]  %s1, 128, %s29, [#allocation7]
    $region9: #{tpu_custom_call.1} parent=1 // pred_fallthru
      _
    // Predicated region
    $region10: #{tpu_custom_call.1} parent=1 // pred_check
      _
    $region11: #{tpu_custom_call.1} parent=1 // pred_check_branch
      %33 = sbr.rel (0) target = $region13
    $region12: #{tpu_custom_call.1} parent=1 // pred_region
      %34 = dma.done [#allocation4], 256
    $region13: #{tpu_custom_call.1} parent=1 // pred_fallthru
      _
    // Predicated region
    $region14: #{tpu_custom_call.1} parent=1 // pred_check
      _
    $region15: #{tpu_custom_call.1} parent=1 // pred_check_branch
      %36 = sbr.rel (0) target = $region17
    $region16: #{tpu_custom_call.1} parent=1 // pred_region
      %37 = dma.done [#allocation7], 128
    $region17: #{tpu_custom_call.1} parent=1 // pred_fallthru
      _
    %p38 = scmp.eq.s32.totalorder 0, 0
    // Predicated region
    $region18: #{tpu_custom_call.1} parent=1 // pred_check
      %p39 = pneg %p38
    $region19: #{tpu_custom_call.1} parent=1 // pred_check_branch
      %41 = sbr.rel (%p39) target = $region21
    $region20: #{tpu_custom_call.1} parent=1 // pred_region
      %42 = vst [vmem:[#allocation2] sm:$0xf] 0.0
      %43 = vst [vmem:[#allocation2 + $0xc] sm:$0xf] 0.0
      %44 = vst [vmem:[#allocation2 + $0x10] sm:$0xf] 0.0
      %45 = vst [vmem:[#allocation2 + $0x1c] sm:$0xf] 0.0
    $region21: #{tpu_custom_call.1} parent=1 // pred_fallthru
      _
    %v46 = vld [vmem:[#allocation3] sm:$0xff]
    %47 = vst [vmem:[#allocation2 + $0x4] sm:$0xff] %v46
    %s48 = scalar_lea.vmem [#allocation3], 8
    %v49 = vld [vmem:[%s48] sm:$0xff]
    %50 = vst [vmem:[#allocation2 + $0x14] sm:$0xff] %v49
    %v51 = vlaneseq
    %v52 = vand.u32 %v51, 127
    %v53 = vadd.s32 %v52, 128
    %v54 = vadd.s32 %v52, 256
    %v55 = vadd.s32 %v52, 384
    %vm56 = vcmp.lt.s32.totalorder %v52, 0
    %v57 = vsub.s32 0, %v52
    %v58 = vsel %vm56, %v57, %v52
    %v59 = vshrl.u32 %v58, 4
    %v60 = vand.u32 %v58, 15
    %v61 = vsub.s32 0, %v60
    %v62 = vsel %vm56, %v61, %v60
    %vm63 = vcmp.lt.s32.totalorder %v53, 0
    %v64 = vsub.s32 0, %v53
    %v65 = vsel %vm63, %v64, %v53
    %v66 = vshrl.u32 %v65, 4
    %v67 = vand.u32 %v65, 15
    %v68 = vsub.s32 0, %v67
    %v69 = vsel %vm63, %v68, %v67
    %vm70 = vcmp.lt.s32.totalorder %v54, 0
    %v71 = vsub.s32 0, %v54
    %v72 = vsel %vm70, %v71, %v54
    %v73 = vshrl.u32 %v72, 4
    %v74 = vand.u32 %v72, 15
    %v75 = vsub.s32 0, %v74
    %v76 = vsel %vm70, %v75, %v74
    %vm77 = vcmp.lt.s32.totalorder %v55, 0
    %v78 = vsub.s32 0, %v55
    %v79 = vsel %vm77, %v78, %v55
    %v80 = vshrl.u32 %v79, 4
    %v81 = vand.u32 %v79, 15
    %v82 = vsub.s32 0, %v81
    %v83 = vsel %vm77, %v82, %v81
    %vm84 = vcmp.ne.s32.totalorder %v62, 0
    %vm85 = vcmp.ne.s32.totalorder %v69, 0
    %vm86 = vcmp.ne.s32.totalorder %v76, 0
    %vm87 = vcmp.ne.s32.totalorder %v83, 0
    %vm88 = vcmp.lt.s32.totalorder %v62, 0
    %vm89 = vcmp.lt.s32.totalorder %v69, 0
    %vm90 = vcmp.lt.s32.totalorder %v76, 0
    %vm91 = vcmp.lt.s32.totalorder %v83, 0
    %vm92 = vmand %vm88, %vm84
    %vm93 = vmand %vm89, %vm85
    %vm94 = vmand %vm90, %vm86
    %vm95 = vmand %vm91, %vm87
    %v96 = vadd.s32 %v62, 16
    %v97 = vadd.s32 %v69, 16
    %v98 = vadd.s32 %v76, 16
    %v99 = vadd.s32 %v83, 16
    %v100 = vsel %vm92, %v96, %v62
    %v101 = vsel %vm93, %v97, %v69
    %v102 = vsel %vm94, %v98, %v76
    %v103 = vsel %vm95, %v99, %v83
    %vm104 = vcmp.ge.s32.totalorder %v100, 1
    %vm105 = vcmp.ge.s32.totalorder %v101, 1
    %vm106 = vcmp.ge.s32.totalorder %v102, 1
    %vm107 = vcmp.ge.s32.totalorder %v103, 1
    %v108 = vsel %vm104, 1, 0
    %v109 = vsel %vm105, 1, 0
    %v110 = vsel %vm106, 1, 0
    %v111 = vsel %vm107, 1, 0
    %vm112 = vcmp.eq.s32.totalorder %v108, 1
    %vm113 = vcmp.eq.s32.totalorder %v109, 1
    %vm114 = vcmp.eq.s32.totalorder %v110, 1
    %vm115 = vcmp.eq.s32.totalorder %v111, 1
    %vm116 = vcmp.le.s32.totalorder %v100, 14
    %vm117 = vcmp.le.s32.totalorder %v101, 14
    %vm118 = vcmp.le.s32.totalorder %v102, 14
    %vm119 = vcmp.le.s32.totalorder %v103, 14
    %v120 = vsel %vm116, 1, 0
    %v121 = vsel %vm117, 1, 0
    %v122 = vsel %vm118, 1, 0
    %v123 = vsel %vm119, 1, 0
    %vm124 = vcmp.eq.s32.totalorder %v120, 1
    %vm125 = vcmp.eq.s32.totalorder %v121, 1
    %vm126 = vcmp.eq.s32.totalorder %v122, 1
    %vm127 = vcmp.eq.s32.totalorder %v123, 1
    %v128 = vld [vmem:[#allocation2] sm:$0xff]
    %v129 = vld [vmem:[#allocation2 + $0x8] sm:$0xf]
    %v130 = vld [vmem:[#allocation2 + $0x10] sm:$0xff]
    %v131 = vld [vmem:[#allocation2 + $0x18] sm:$0xf]
    %v134 = vcombine.high %v128, %v128
    %135 = vrot.lane.b32.xlu0 %v128, 17
    %v136 = vpop.permute.xlu0 %135
    %137 = vrot.lane.b32.xlu0 %v134, 17
    %v138 = vpop.permute.xlu0 %137
    %139 = vrot.lane.b32.xlu0 %v129, 17
    %v140 = vpop.permute.xlu0 %139
    %vm141 = vcmask 138240
    %v142 = vsel %vm141, %v136, %v138
    %v143 = vsel %vm141, %v138, %v140
    %v148 = vcombine.high %v130, %v130
    %149 = vrot.lane.b32.xlu0 %v130, 17
    %v150 = vpop.permute.xlu0 %149
    %151 = vrot.lane.b32.xlu0 %v148, 17
    %v152 = vpop.permute.xlu0 %151
    %153 = vrot.lane.b32.xlu0 %v131, 17
    %v154 = vpop.permute.xlu0 %153
    %v155 = vsel %vm141, %v150, %v152
    %v156 = vsel %vm141, %v152, %v154
    %v159 = vsel %vm112, %v142, 0.0
    %v160 = vsel %vm113, %v143, 0.0
    %v161 = vsel %vm114, %v155, 0.0
    %v162 = vsel %vm115, %v156, 0.0
    %163 = vrot.lane.b32.xlu0 %v128, 16
    %v164 = vpop.permute.xlu0 %163
    %165 = vrot.lane.b32.xlu0 %v134, 16
    %v166 = vpop.permute.xlu0 %165
    %167 = vrot.lane.b32.xlu0 %v129, 16
    %v168 = vpop.permute.xlu0 %167
    %vm169 = vcmask 130048
    %v170 = vsel %vm169, %v164, %v166
    %v171 = vsel %vm169, %v166, %v168
    %172 = vrot.lane.b32.xlu0 %v130, 16
    %v173 = vpop.permute.xlu0 %172
    %174 = vrot.lane.b32.xlu0 %v148, 16
    %v175 = vpop.permute.xlu0 %174
    %176 = vrot.lane.b32.xlu0 %v131, 16
    %v177 = vpop.permute.xlu0 %176
    %v178 = vsel %vm169, %v173, %v175
    %v179 = vsel %vm169, %v175, %v177
    %180 = vrot.lane.b32.xlu0 %v128, 15
    %v181 = vpop.permute.xlu0 %180
    %182 = vrot.lane.b32.xlu0 %v134, 15
    %v183 = vpop.permute.xlu0 %182
    %184 = vrot.lane.b32.xlu0 %v129, 15
    %v185 = vpop.permute.xlu0 %184
    %vm186 = vcmask 121856
    %v187 = vsel %vm186, %v181, %v183
    %v188 = vsel %vm186, %v183, %v185
    %191 = vrot.lane.b32.xlu0 %v130, 15
    %v192 = vpop.permute.xlu0 %191
    %193 = vrot.lane.b32.xlu0 %v148, 15
    %v194 = vpop.permute.xlu0 %193
    %195 = vrot.lane.b32.xlu0 %v131, 15
    %v196 = vpop.permute.xlu0 %195
    %v197 = vsel %vm186, %v192, %v194
    %v198 = vsel %vm186, %v194, %v196
    %v201 = vsel %vm124, %v187, 0.0
    %v202 = vsel %vm125, %v188, 0.0
    %v203 = vsel %vm126, %v197, 0.0
    %v204 = vsel %vm127, %v198, 0.0
    %205 = vrot.lane.b32.xlu0 %v128, 1
    %v206 = vpop.permute.xlu0 %205
    %207 = vrot.lane.b32.xlu0 %v134, 1
    %v208 = vpop.permute.xlu0 %207
    %209 = vrot.lane.b32.xlu0 %v129, 1
    %v210 = vpop.permute.xlu0 %209
    %vm211 = vcmask 7168
    %v212 = vsel %vm211, %v206, %v208
    %v213 = vsel %vm211, %v208, %v210
    %216 = vrot.lane.b32.xlu0 %v130, 1
    %v217 = vpop.permute.xlu0 %216
    %218 = vrot.lane.b32.xlu0 %v148, 1
    %v219 = vpop.permute.xlu0 %218
    %220 = vrot.lane.b32.xlu0 %v131, 1
    %v221 = vpop.permute.xlu0 %220
    %v222 = vsel %vm211, %v217, %v219
    %v223 = vsel %vm211, %v219, %v221
    %v226 = vsel %vm112, %v212, 0.0
    %v227 = vsel %vm113, %v213, 0.0
    %v228 = vsel %vm114, %v222, 0.0
    %v229 = vsel %vm115, %v223, 0.0
    %v230 = vld [vmem:[#allocation2 + $0x4] sm:$0xff]
    %v231 = vld [vmem:[#allocation2 + $0x14] sm:$0xff]
    %v233 = vcombine.high %v230, %v230
    %v236 = vcombine.high %v231, %v231
    %v238 = vld [vmem:[#allocation2 + $0xc] sm:$0xf]
    %v239 = vld [vmem:[#allocation2 + $0x14] sm:$0xff]
    %v240 = vld [vmem:[#allocation2 + $0x1c] sm:$0xf]
    %242 = vrot.lane.b32.xlu0 %v230, 127
    %v243 = vpop.permute.xlu0 %242
    %244 = vrot.lane.b32.xlu0 %v233, 127
    %v245 = vpop.permute.xlu0 %244
    %246 = vrot.lane.b32.xlu0 %v238, 127
    %v247 = vpop.permute.xlu0 %246
    %vm248 = vcmask 1039360
    %v249 = vsel %vm248, %v243, %v245
    %v250 = vsel %vm248, %v245, %v247
    %v255 = vcombine.high %v239, %v239
    %256 = vrot.lane.b32.xlu0 %v239, 127
    %v257 = vpop.permute.xlu0 %256
    %258 = vrot.lane.b32.xlu0 %v255, 127
    %v259 = vpop.permute.xlu0 %258
    %260 = vrot.lane.b32.xlu0 %v240, 127
    %v261 = vpop.permute.xlu0 %260
    %v262 = vsel %vm248, %v257, %v259
    %v263 = vsel %vm248, %v259, %v261
    %v266 = vsel %vm124, %v249, 0.0
    %v267 = vsel %vm125, %v250, 0.0
    %v268 = vsel %vm126, %v262, 0.0
    %v269 = vsel %vm127, %v263, 0.0
    %270 = vrot.lane.b32.xlu0 %v230, 113
    %v271 = vpop.permute.xlu0 %270
    %272 = vrot.lane.b32.xlu0 %v233, 113
    %v273 = vpop.permute.xlu0 %272
    %274 = vrot.lane.b32.xlu0 %v238, 113
    %v275 = vpop.permute.xlu0 %274
    %vm276 = vcmask 924672
    %v277 = vsel %vm276, %v271, %v273
    %v278 = vsel %vm276, %v273, %v275
    %281 = vrot.lane.b32.xlu0 %v239, 113
    %v282 = vpop.permute.xlu0 %281
    %283 = vrot.lane.b32.xlu0 %v255, 113
    %v284 = vpop.permute.xlu0 %283
    %285 = vrot.lane.b32.xlu0 %v240, 113
    %v286 = vpop.permute.xlu0 %285
    %v287 = vsel %vm276, %v282, %v284
    %v288 = vsel %vm276, %v284, %v286
    %v291 = vsel %vm112, %v277, 0.0
    %v292 = vsel %vm113, %v278, 0.0
    %v293 = vsel %vm114, %v287, 0.0
    %v294 = vsel %vm115, %v288, 0.0
    %295 = vrot.lane.b32.xlu0 %v230, 112
    %v296 = vpop.permute.xlu0 %295
    %297 = vrot.lane.b32.xlu0 %v233, 112
    %v298 = vpop.permute.xlu0 %297
    %299 = vrot.lane.b32.xlu0 %v238, 112
    %v300 = vpop.permute.xlu0 %299
    %vm301 = vcmask 916480
    %v302 = vsel %vm301, %v296, %v298
    %v303 = vsel %vm301, %v298, %v300
    %304 = vrot.lane.b32.xlu0 %v239, 112
    %v305 = vpop.permute.xlu0 %304
    %306 = vrot.lane.b32.xlu0 %v255, 112
    %v307 = vpop.permute.xlu0 %306
    %308 = vrot.lane.b32.xlu0 %v240, 112
    %v309 = vpop.permute.xlu0 %308
    %v310 = vsel %vm301, %v305, %v307
    %v311 = vsel %vm301, %v307, %v309
    %312 = vrot.lane.b32.xlu0 %v230, 111
    %v313 = vpop.permute.xlu0 %312
    %314 = vrot.lane.b32.xlu0 %v233, 111
    %v315 = vpop.permute.xlu0 %314
    %316 = vrot.lane.b32.xlu0 %v238, 111
    %v317 = vpop.permute.xlu0 %316
    %vm318 = vcmask 908288
    %v319 = vsel %vm318, %v313, %v315
    %v320 = vsel %vm318, %v315, %v317
    %323 = vrot.lane.b32.xlu0 %v239, 111
    %v324 = vpop.permute.xlu0 %323
    %325 = vrot.lane.b32.xlu0 %v255, 111
    %v326 = vpop.permute.xlu0 %325
    %327 = vrot.lane.b32.xlu0 %v240, 111
    %v328 = vpop.permute.xlu0 %327
    %v329 = vsel %vm318, %v324, %v326
    %v330 = vsel %vm318, %v326, %v328
    %v333 = vsel %vm124, %v319, 0.0
    %v334 = vsel %vm125, %v320, 0.0
    %v335 = vsel %vm126, %v329, 0.0
    %v336 = vsel %vm127, %v330, 0.0
    %v337 = vrot.slane %v170, 4
    %v338 = vrot.slane %v171, 4
    %v339 = vrot.slane %v178, 4
    %v340 = vrot.slane %v179, 4
    %v349 = vrot.slane %v226, 4
    %v350 = vrot.slane %v227, 4
    %v351 = vrot.slane %v228, 4
    %v352 = vrot.slane %v229, 4
    %v361 = vrot.slane %v266, 4
    %v362 = vrot.slane %v267, 4
    %v363 = vrot.slane %v268, 4
    %v364 = vrot.slane %v269, 4
    %v369 = vrot.slane %v302, 4
    %v370 = vrot.slane %v303, 4
    %v371 = vrot.slane %v310, 4
    %v372 = vrot.slane %v311, 4
    %vm377 = vcmask 1043456
    %v378 = vsel %vm377, %v159, %v337
    %v379 = vsel %vm377, %v160, %v338
    %v380 = vsel %vm377, %v161, %v339
    %v381 = vsel %vm377, %v162, %v340
    %v382 = vsel %vm377, %v201, %v349
    %v383 = vsel %vm377, %v202, %v350
    %v384 = vsel %vm377, %v203, %v351
    %v385 = vsel %vm377, %v204, %v352
    %v386 = vsel %vm377, %v230, %v361
    %v387 = vsel %vm377, %v233, %v362
    %v388 = vsel %vm377, %v231, %v363
    %v389 = vsel %vm377, %v236, %v364
    %v390 = vsel %vm377, %v291, %v369
    %v391 = vsel %vm377, %v292, %v370
    %v392 = vsel %vm377, %v293, %v371
    %v393 = vsel %vm377, %v294, %v372
    %v394 = vsel %vm377, %v333, 1.0
    %v395 = vsel %vm377, %v334, 1.0
    %v396 = vsel %vm377, %v335, 1.0
    %v397 = vsel %vm377, %v336, 1.0
    %v398 = vld [vmem:[#allocation6] sm:$0xff]
    %vm399 = vcmask 302080
    %v401 = vsel %vm399, %v398, 0
    %vm403 = vcmask 1044480
    %v405 = vsel %vm403, %v394, 0
    %v408 = vsel %vm403, %v395, 0
    %v411 = vsel %vm403, %v396, 0
    %v414 = vsel %vm403, %v397, 0
    %416 = vmatprep.subr.mxu0 %v379
    %417 = vmatpush1.msra.mxu0 %v378
    %418 = vmatprep.subr.mxu0 %v383
    %419 = vmatpush1.msra.mxu0 %v382
    %420 = vmatprep.subr.mxu0 %v387
    %421 = vmatpush1.msra.mxu0 %v386
    %422 = vmatprep.subr.mxu0 %v391
    %423 = vmatpush1.msra.mxu0 %v390
    %424 = vmatprep.subr.mxu0 %v408
    %425 = vmatpush1.msra.mxu0 %v405
    %426 = vmatprep.subr.mxu0 0.0
    %427 = vmatpush1.msra.mxu0 0.0
    %428 = vmatprep.subr.mxu0 0.0
    %429 = vmatpush1.msra.mxu0 0.0
    %430 = vmatprep.subr.mxu0 0.0
    %431 = vmatpush1.msra.mxu0 0.0
    %432 = vmatprep.subr.mxu0 0.0
    %433 = vmatpush1.msra.mxu0 0.0
    %434 = vmatprep.subr.mxu0 0.0
    %435 = vmatpush1.msra.mxu0 0.0
    %436 = vmatprep.subr.mxu0 0.0
    %437 = vmatpush1.msra.mxu0 0.0
    %438 = vmatprep.subr.mxu0 0.0
    %439 = vmatpush1.msra.mxu0 0.0
    %440 = vmatprep.subr.mxu0 0.0
    %441 = vmatpush1.msra.mxu0 0.0
    %442 = vmatprep.subr.mxu0 0.0
    %443 = vmatpush1.msra.mxu0 0.0
    %444 = vmatprep.subr.mxu0 0.0
    %445 = vmatpush1.msra.mxu0 0.0
    %446 = vmatprep.subr.mxu0 0.0
    %447 = vmatpush1.msra.mxu0 0.0
    %448 = vmatprep.subr.mxu0 0.0
    %449 = vmatpush1.msra.mxu0 0.0
    %450 = vmatprep.subr.mxu0 0.0
    %451 = vmatpush1.msra.mxu0 0.0
    %452 = vmatprep.subr.mxu0 0.0
    %453 = vmatpush1.msra.mxu0 0.0
    %454 = vmatprep.subr.mxu0 0.0
    %455 = vmatpush1.msra.mxu0 0.0
    %456 = vmatprep.subr.mxu0 0.0
    %457 = vmatpush1.msra.mxu0 0.0
    %458 = vmatprep.subr.mxu0 0.0
    %459 = vmatpush1.msra.mxu0 0.0
    %460 = vmatprep.subr.mxu0 0.0
    %461 = vmatpush1.msra.mxu0 0.0
    %462 = vmatprep.subr.mxu0 0.0
    %463 = vmatpush1.msra.mxu0 0.0
    %464 = vmatprep.subr.mxu0 0.0
    %465 = vmatpush1.msra.mxu0 0.0
    %466 = vmatprep.subr.mxu0 0.0
    %467 = vmatpush1.msra.mxu0 0.0
    %468 = vmatprep.subr.mxu0 0.0
    %469 = vmatpush1.msra.mxu0 0.0
    %470 = vmatprep.subr.mxu0 0.0
    %471 = vmatpush1.msra.mxu0 0.0
    %472 = vmatprep.subr.mxu0 0.0
    %473 = vmatpush1.msra.mxu0 0.0
    %474 = vmatprep.subr.mxu0 0.0
    %475 = vmatpush1.msra.mxu0 0.0
    %476 = vmatprep.subr.mxu0 0.0
    %477 = vmatpush1.msra.mxu0 0.0
    %478 = vmatprep.subr.mxu0 0.0
    %479 = vmatpush1.msra.mxu0 0.0
    %480 = vmatprep.mubr.f32.mxu0 0.0
    %481 = vmatmul.mubr.f32.gmra.mrb[0].mxu0 %v401
    %v482 = vpop.f32.mrb[0].mxu0
    %v483 = vadd.f32 0.0, %v482
    %v484 = vpop.f32.mrb[0].mxu0
    %v485 = vadd.f32 0.0, %v484
    %486 = vdwg.mxu0
    %487 = vmatprep.subr.mxu0 %v381
    %488 = vmatpush1.msra.mxu0 %v380
    %489 = vmatprep.subr.mxu0 %v385
    %490 = vmatpush1.msra.mxu0 %v384
    %491 = vmatprep.subr.mxu0 %v389
    %492 = vmatpush1.msra.mxu0 %v388
    %493 = vmatprep.subr.mxu0 %v393
    %494 = vmatpush1.msra.mxu0 %v392
    %495 = vmatprep.subr.mxu0 %v414
    %496 = vmatpush1.msra.mxu0 %v411
    %497 = vmatprep.subr.mxu0 0.0
    %498 = vmatpush1.msra.mxu0 0.0
    %499 = vmatprep.subr.mxu0 0.0
    %500 = vmatpush1.msra.mxu0 0.0
    %501 = vmatprep.subr.mxu0 0.0
    %502 = vmatpush1.msra.mxu0 0.0
    %503 = vmatprep.subr.mxu0 0.0
    %504 = vmatpush1.msra.mxu0 0.0
    %505 = vmatprep.subr.mxu0 0.0
    %506 = vmatpush1.msra.mxu0 0.0
    %507 = vmatprep.subr.mxu0 0.0
    %508 = vmatpush1.msra.mxu0 0.0
    %509 = vmatprep.subr.mxu0 0.0
    %510 = vmatpush1.msra.mxu0 0.0
    %511 = vmatprep.subr.mxu0 0.0
    %512 = vmatpush1.msra.mxu0 0.0
    %513 = vmatprep.subr.mxu0 0.0
    %514 = vmatpush1.msra.mxu0 0.0
    %515 = vmatprep.subr.mxu0 0.0
    %516 = vmatpush1.msra.mxu0 0.0
    %517 = vmatprep.subr.mxu0 0.0
    %518 = vmatpush1.msra.mxu0 0.0
    %519 = vmatprep.subr.mxu0 0.0
    %520 = vmatpush1.msra.mxu0 0.0
    %521 = vmatprep.subr.mxu0 0.0
    %522 = vmatpush1.msra.mxu0 0.0
    %523 = vmatprep.subr.mxu0 0.0
    %524 = vmatpush1.msra.mxu0 0.0
    %525 = vmatprep.subr.mxu0 0.0
    %526 = vmatpush1.msra.mxu0 0.0
    %527 = vmatprep.subr.mxu0 0.0
    %528 = vmatpush1.msra.mxu0 0.0
    %529 = vmatprep.subr.mxu0 0.0
    %530 = vmatpush1.msra.mxu0 0.0
    %531 = vmatprep.subr.mxu0 0.0
    %532 = vmatpush1.msra.mxu0 0.0
    %533 = vmatprep.subr.mxu0 0.0
    %534 = vmatpush1.msra.mxu0 0.0
    %535 = vmatprep.subr.mxu0 0.0
    %536 = vmatpush1.msra.mxu0 0.0
    %537 = vmatprep.subr.mxu0 0.0
    %538 = vmatpush1.msra.mxu0 0.0
    %539 = vmatprep.subr.mxu0 0.0
    %540 = vmatpush1.msra.mxu0 0.0
    %541 = vmatprep.subr.mxu0 0.0
    %542 = vmatpush1.msra.mxu0 0.0
    %543 = vmatprep.subr.mxu0 0.0
    %544 = vmatpush1.msra.mxu0 0.0
    %545 = vmatprep.subr.mxu0 0.0
    %546 = vmatpush1.msra.mxu0 0.0
    %547 = vmatprep.subr.mxu0 0.0
    %548 = vmatpush1.msra.mxu0 0.0
    %549 = vmatprep.subr.mxu0 0.0
    %550 = vmatpush1.msra.mxu0 0.0
    %551 = vmatprep.mubr.f32.mxu0 0.0
    %552 = vmatmul.mubr.f32.gmra.mrb[0].mxu0 %v401
    %v553 = vpop.f32.mrb[0].mxu0
    %v554 = vadd.f32 0.0, %v553
    %v555 = vpop.f32.mrb[0].mxu0
    %v556 = vadd.f32 0.0, %v555
    %557 = vdwg.mxu0
    %v562 = vrot.slane %v483, 4
    %v563 = vrot.slane %v485, 4
    %v564 = vrot.slane %v554, 4
    %v565 = vrot.slane %v556, 4
    %v570 = vmax.f32 %v483, %v562
    %v571 = vmax.f32 %v485, %v563
    %v572 = vmax.f32 %v554, %v564
    %v573 = vmax.f32 %v556, %v565
    %v576 = vrot.slane %v572, 4
    %v577 = vrot.slane %v573, 4
    %v580 = vsel %vm377, %v570, %v576
    %v581 = vsel %vm377, %v571, %v577
    %582 = vst [vmem:[#allocation8] sm:$0xff] %v580
    %583 = vst [vmem:[#allocation8 + $0x8] sm:$0xff] %v581
    // Predicated region
    $region22: #{tpu_custom_call.1} parent=1 // pred_check
      _
    $region23: #{tpu_custom_call.1} parent=1 // pred_check_branch
      %585 = sbr.rel (0) target = $region25
    $region24: #{tpu_custom_call.1} parent=1 // pred_region
      %s587 = ssub.s32 256, 256
      %588 = vsyncadd [#allocation5], %s587
      %s590 = sshll.u32 [#allocation8], 4
      %s591 = int_to_ptr.vmem [resolvable:$true] %s590
      %593 = dma.vmem_to_hbm [thread:$0]  %s591, 256, %s2, [#allocation5]
    $region25: #{tpu_custom_call.1} parent=1 // pred_fallthru
      _
    // Predicated region
    $region26: #{tpu_custom_call.1} parent=1 // pred_check
      _
    $region27: #{tpu_custom_call.1} parent=1 // pred_check_branch
      %595 = sbr.rel (0) target = $region29
    $region28: #{tpu_custom_call.1} parent=1 // pred_region
      %596 = dma.done [#allocation5], 256
    $region29: #{tpu_custom_call.1} parent=1 // pred_fallthru
      _
    %597 = vsyncpa [#allocation4], 1
    %598 = vsyncpa [#allocation7], 1
    %599 = vsyncpa [#allocation5], 1

</llo_original>
